<compile_context>
chip_gen: v7x
topology: tpu7x:2x2x1
jax: 0.10.0
libtpu: 0.0.40
codegen_flags: <defaults>
</compile_context>

<pallas_src>
import functools

import numpy as np
import jax
import jax.numpy as jnp
from jax.experimental import pallas as pl
from jax.experimental.pallas import tpu as pltpu

# ----------------------------------------------------------------------------
# hyper-params (small synthetic config consistent with the module's __init__)
# ----------------------------------------------------------------------------
CL, CM, CH = 8, 16, 16          # args.cl, args.cm, args.ch
INPUT_NC = 3
OUTPUT_NC = 3
NFRAMES = 3

RELU = 0.0      # leaky slope 0.0 == ReLU
LRELU = 0.1     # nn.LeakyReLU(0.1)
PRELU = 0.25    # nn.PReLU() default init folded to a constant (num_parameters=1, init=0.25)

TILE_M_MAX = 1024                       # lane-dim tile of the matmul grid
VMEM_LIMIT = 32 * 1024 * 1024           # fits v5e/v6e/v7x scoped VMEM comfortably


def _round_up(v, m):
    return (v + m - 1) // m * m


# ----------------------------------------------------------------------------
# Pallas kernels: fused matmul + bias + activation (+ optional residual)
# out(Cout, TILE_M) = act(W(Cout,K) @ A(K,TILE_M) + b [+ R]) — lane dim = spatial M
# ----------------------------------------------------------------------------
def _mm_kernel(w_ref, b_ref, a_ref, o_ref, *, slope):
    acc = jnp.dot(w_ref[...], a_ref[...], preferred_element_type=jnp.float32)
    acc = acc + b_ref[...]                         # (N,1) broadcast over lanes
    if slope is not None:                          # leaky-relu family, f32 epilogue
        acc = jnp.maximum(acc, 0.0) + slope * jnp.minimum(acc, 0.0)
    o_ref[...] = acc


def _mm_res_kernel(w_ref, b_ref, a_ref, r_ref, o_ref, *, slope):
    # residual add fused into the matmul epilogue (ResNeSt "res += x; act(res)")
    acc = jnp.dot(w_ref[...], a_ref[...], preferred_element_type=jnp.float32)
    acc = acc + b_ref[...] + r_ref[...]
    if slope is not None:
        acc = jnp.maximum(acc, 0.0) + slope * jnp.minimum(acc, 0.0)
    o_ref[...] = acc


@functools.lru_cache(maxsize=None)
def _get_mm(n, k, m_pad, tile_m, slope, has_res):
    kernel = functools.partial(_mm_res_kernel if has_res else _mm_kernel, slope=slope)
    in_specs = [
        pl.BlockSpec((n, k), lambda i: (0, 0)),         # weight: VMEM-resident over M tiles
        pl.BlockSpec((n, 1), lambda i: (0, 0)),         # bias:   VMEM-resident
        pl.BlockSpec((k, tile_m), lambda i: (0, i)),    # A tile (lane-dense spatial)
    ]
    if has_res:
        in_specs.append(pl.BlockSpec((n, tile_m), lambda i: (0, i)))
    return pl.pallas_call(
        kernel,
        out_shape=jax.ShapeDtypeStruct((n, m_pad), jnp.float32),
        grid=(m_pad // tile_m,),
        in_specs=in_specs,
        out_specs=pl.BlockSpec((n, tile_m), lambda i: (0, i)),
        compiler_params=pltpu.CompilerParams(
            dimension_semantics=("parallel",),          # megacore sharding on v7x
            vmem_limit_bytes=VMEM_LIMIT,
        ),
    )


def matmul_cm(wm, bias, a, slope, residual=None):
    """wm: (N,K) bf16, bias: (N,1) f32, a: (K,M) bf16, residual: (N,M) f32 -> (N,M) f32."""
    n, k = wm.shape
    m = a.shape[1]
    tile_m = min(TILE_M_MAX, _round_up(m, 128))
    m_pad = _round_up(m, tile_m)
    if m_pad != m:
        a = jnp.pad(a, ((0, 0), (0, m_pad - m)))
        if residual is not None:
            residual = jnp.pad(residual, ((0, 0), (0, m_pad - m)))
    fn = _get_mm(n, k, m_pad, tile_m, slope, residual is not None)
    out = fn(wm, bias, a) if residual is None else fn(wm, bias, a, residual)
    return out if m_pad == m else out[:, :m]


# ----------------------------------------------------------------------------
# conv wrappers (im2col in JAX glue -> lane-dense Pallas matmul)
# activations are kept in the channels-first "CM" layout (C, B, H, W)
# ----------------------------------------------------------------------------
def _im2col(x, k, stride, padding):
    """x: (C,B,H,W) f32 -> (K, M) bf16 with K = k*k*C (tap-major, cin-minor), M = B*Ho*Wo."""
    c, b, h, w = x.shape
    xp = jnp.pad(x, ((0, 0), (0, 0), (padding, padding), (padding, padding))) if padding else x
    ho = (h + 2 * padding - k) // stride + 1
    wo = (w + 2 * padding - k) // stride + 1
    taps = []
    for dy in range(k):
        for dx in range(k):
            taps.append(xp[:, :, dy:dy + stride * (ho - 1) + 1:stride,
                               dx:dx + stride * (wo - 1) + 1:stride])
    a = jnp.stack(taps, axis=0).reshape(k * k * c, b * ho * wo).astype(jnp.bfloat16)
    return a, ho, wo


def conv_cm(x, p, stride, padding, slope, residual=None):
    """Conv2d.  x: (Cin,B,H,W) f32 -> (Cout,B,Ho,Wo) f32.  residual fused into epilogue."""
    c, b, h, w = x.shape
    k = p["k"]
    if k == 1 and stride == 1 and padding == 0:
        a, ho, wo = x.reshape(c, b * h * w).astype(jnp.bfloat16), h, w
    else:
        a, ho, wo = _im2col(x, k, stride, padding)
    r = None if residual is None else residual.reshape(p["cout"], b * ho * wo)
    out = matmul_cm(p["wm"], p["b"], a, slope, residual=r)
    return out.reshape(p["cout"], b, ho, wo)


def deconv4x_cm(x, p, slope):
    """ConvTranspose2d(k=8, s=4, p=2) as one matmul: 16-phase expanded weight over a
    3x3/pad-1 im2col, then pixel-shuffle.  Exact; avoids the 4x zero-dilated tensor."""
    c, b, h, w = x.shape
    a, _, _ = _im2col(x, 3, 1, 1)
    out = matmul_cm(p["wm"], p["b"], a, slope)                # (16*Cout, B*H*W)
    cout = p["cout"]
    out = out.reshape(4, 4, cout, b, h, w)                    # (py, px, co, b, h, w)
    out = jnp.transpose(out, (2, 3, 4, 0, 5, 1)).reshape(cout, b, 4 * h, 4 * w)
    return out


def _up_nearest(x, f):
    return jnp.repeat(jnp.repeat(x, f, axis=2), f, axis=3)


# ----------------------------------------------------------------------------
# deterministic parameter construction (matmul-ready matrices built once)
# ----------------------------------------------------------------------------
class KeyGen:
    def __init__(self, seed):
        self.key = jax.random.PRNGKey(seed)

    def __call__(self):
        self.key, sub = jax.random.split(self.key)
        return sub


def make_conv(kg, cin, cout, k, groups=1, bias=True, scale=0.05):
    """Grouped conv stored as a block-diagonal dense (Cout, K) matmul weight (bf16)."""
    cin_g, cout_g = cin // groups, cout // groups
    w = np.zeros((k, k, cin, cout), np.float32)
    for g in range(groups):
        blk = np.asarray(scale * jax.random.normal(kg(), (k, k, cin_g, cout_g), jnp.float32))
        w[:, :, g * cin_g:(g + 1) * cin_g, g * cout_g:(g + 1) * cout_g] = blk
    b = (0.01 * np.asarray(jax.random.normal(kg(), (cout,), jnp.float32))
         if bias else np.zeros((cout,), np.float32))
    wm = jnp.asarray(w.transpose(3, 0, 1, 2).reshape(cout, k * k * cin)).astype(jnp.bfloat16)
    return {"wm": wm, "b": jnp.asarray(b.reshape(cout, 1)), "k": k, "cout": cout}


def make_deconv(kg, cin, cout, scale=0.05):
    """ConvTranspose2d(cin, cout, k=8, s=4, p=2): build the 16-phase expanded weight
    (16*Cout, 9*Cin) used by deconv4x_cm.  out[4q+ph] = sum_d W[ph+2-4d] x[q+d], d in {-1,0,1}."""
    w = np.asarray(scale * jax.random.normal(kg(), (8, 8, cin, cout), jnp.float32))
    b = np.asarray(0.01 * jax.random.normal(kg(), (cout,), jnp.float32))
    wb = np.zeros((4, 4, cout, 3, 3, cin), np.float32)
    for py in range(4):
        for dyi in range(3):                       # tap dy_i <-> input offset dy_i - 1
            ky = py + 6 - 4 * dyi
            if not 0 <= ky < 8:
                continue
            for px in range(4):
                for dxi in range(3):
                    kx = px + 6 - 4 * dxi
                    if not 0 <= kx < 8:
                        continue
                    wb[py, px, :, dyi, dxi, :] = w[ky, kx].T      # (Cout, Cin)
    wm = jnp.asarray(wb.reshape(16 * cout, 9 * cin)).astype(jnp.bfloat16)
    bb = jnp.asarray(np.tile(b.reshape(1, cout), (16, 1)).reshape(16 * cout, 1))
    return {"wm": wm, "b": bb, "cout": cout}


def make_fc(kg, cin, cout, groups, scale=0.05):
    """1x1 grouped conv on a (C, B) tensor -> tiny dense block-diagonal matmul (plain XLA)."""
    cin_g, cout_g = cin // groups, cout // groups
    w = np.zeros((cout, cin), np.float32)
    for g in range(groups):
        blk = np.asarray(scale * jax.random.normal(kg(), (cout_g, cin_g), jnp.float32))
        w[g * cout_g:(g + 1) * cout_g, g * cin_g:(g + 1) * cin_g] = blk
    b = np.asarray(0.01 * jax.random.normal(kg(), (cout,), jnp.float32))
    return {"w": jnp.asarray(w), "b": jnp.asarray(b.reshape(cout, 1))}


def make_splat(kg, gw):
    inter = max(gw * 2 // 4, 32)
    return {
        "conv": make_conv(kg, gw, gw * 2, 3, groups=4, bias=False),   # groups = cardinality*radix
        "fc1": make_fc(kg, gw, inter, groups=2),
        "fc2": make_fc(kg, inter, gw * 2, groups=2),
        "gw": gw,
    }


def make_resnest(kg, ch):
    gw = ch // 2
    return {
        "c1": make_conv(kg, ch, gw, 1, bias=False),
        "splat": make_splat(kg, gw),
        "c2": make_conv(kg, gw, ch, 1, bias=False),
    }


def make_resblocks(kg, ch, n=5):
    return [make_resnest(kg, ch) for _ in range(n)]


def make_upu(kg, ch):
    # TODO(synk): EUPU source not provided; standard DBPN up-projection unit used.
    return {"up1": make_deconv(kg, ch, ch), "down1": make_conv(kg, ch, ch, 8),
            "up2": make_deconv(kg, ch, ch)}


def make_dpu(kg, ch):
    # TODO(synk): EDPU source not provided; standard DBPN down-projection unit used.
    return {"down1": make_conv(kg, ch, ch, 8), "up1": make_deconv(kg, ch, ch),
            "down2": make_conv(kg, ch, ch, 8)}


def make_sisr(kg, cl, ch):
    return {"pre": make_conv(kg, cl, ch, 1),
            "upu": [make_upu(kg, ch) for _ in range(3)],
            "dpu": [make_dpu(kg, ch) for _ in range(2)],
            "rec": make_conv(kg, 3 * ch, ch, 1)}


def make_projection(kg, cl, cm, ch):
    return {
        "misr": {"res": make_resblocks(kg, cm), "up": make_deconv(kg, cm, ch)},
        "sisr": make_sisr(kg, cl, ch),
        "res": {"res": make_resblocks(kg, ch), "conv": make_conv(kg, ch, ch, 3)},
        "dec": {"res": make_resblocks(kg, ch), "conv": make_conv(kg, ch, cl, 8)},
    }


def make_tanet(kg):
    return {
        "conv1": make_conv(kg, INPUT_NC, CL, 3),
        "enc_conv": make_conv(kg, INPUT_NC, CM, 3),
        "enc_res": make_resblocks(kg, CM),
        "l2c1": make_conv(kg, CM, CM, 3),
        "l2c2": make_conv(kg, CM, CM, 3),
        "l3c1": make_conv(kg, CM, CM, 3),
        "l3c2": make_conv(kg, CM, CM, 3),
        # TODO(synk): PCD_Align uses modulated deformable convs (DCNv2); no Pallas
        # equivalent — approximated with a 3x3 fusion conv over the nbr/ref pyramids.
        "pcd": make_conv(kg, 6 * CM, CM, 3),
        "proj": make_projection(kg, CL, CM, CH),
        "rec": make_conv(kg, NFRAMES * CH, OUTPUT_NC, 3),
    }


# ----------------------------------------------------------------------------
# forward functions (mirror the PyTorch modules; activations in (C,B,H,W) layout)
# ----------------------------------------------------------------------------
def splat_fwd(p, x):
    """SplAtConv2d, radix=2, cardinality=2, no BN."""
    gw = p["gw"]
    y = conv_cm(x, p["conv"], 1, 1, slope=RELU)          # grouped conv + ReLU
    x1, x2 = y[:gw], y[gw:]                              # radix split
    gap = jnp.mean(x1 + x2, axis=(2, 3))                 # adaptive_avg_pool2d -> (gw, B)
    # attention path has M = batch -> plain XLA (a Pallas launch would be pure overhead)
    gap = jnp.maximum(jnp.dot(p["fc1"]["w"], gap) + p["fc1"]["b"], 0.0)
    att = jnp.dot(p["fc2"]["w"], gap) + p["fc2"]["b"]    # (2*gw, B)
    # rSoftMax: view(batch, channels, radix) => logit(i, r) = fc2_out[i*radix + r]
    att = jax.nn.softmax(att.reshape(gw, 2, -1), axis=1)
    a1 = att[:, 0][:, :, None, None]
    a2 = att[:, 1][:, :, None, None]
    return a1 * x1 + a2 * x2


def resnest_fwd(p, x, slope):
    r = conv_cm(x, p["c1"], 1, 0, slope=RELU)
    r = splat_fwd(p["splat"], r)
    # res += x ; act  — fused into the c2 matmul epilogue
    return conv_cm(r, p["c2"], 1, 0, slope=slope, residual=x)


def resblocks_fwd(ps, x, slope=PRELU):
    for p in ps:
        x = resnest_fwd(p, x, slope)
    return x


def upu_fwd(p, x):
    h0 = deconv4x_cm(x, p["up1"], slope=PRELU)
    l0 = conv_cm(h0, p["down1"], 4, 2, slope=PRELU)
    h1 = deconv4x_cm(l0 - x, p["up2"], slope=PRELU)
    return h1 + h0


def dpu_fwd(p, x):
    l0 = conv_cm(x, p["down1"], 4, 2, slope=PRELU)
    h0 = deconv4x_cm(l0, p["up1"], slope=PRELU)
    l1 = conv_cm(h0 - x, p["down2"], 4, 2, slope=PRELU)
    return l1 + l0


def sisr_fwd(p, x):
    x = conv_cm(x, p["pre"], 1, 0, slope=PRELU)
    h1 = upu_fwd(p["upu"][0], x)
    h2 = upu_fwd(p["upu"][1], dpu_fwd(p["dpu"][0], h1))
    h3 = upu_fwd(p["upu"][2], dpu_fwd(p["dpu"][1], h2))
    return conv_cm(jnp.concatenate([h3, h2, h1], axis=0), p["rec"], 1, 0, slope=None)


def misr_fwd(p, x):
    x = resblocks_fwd(p["res"], x)
    return deconv4x_cm(x, p["up"], slope=PRELU)


def residual_fwd(p, x):
    x = resblocks_fwd(p["res"], x)
    return conv_cm(x, p["conv"], 1, 1, slope=PRELU)


def decoder_fwd(p, x):
    x = resblocks_fwd(p["res"], x)
    return conv_cm(x, p["conv"], 4, 2, slope=PRELU)


def projection_fwd(p, m, low):
    hm = misr_fwd(p["misr"], m)
    hl = sisr_fwd(p["sisr"], low)
    hm = residual_fwd(p["res"], hl - hm)
    hl = hl + hm
    next_l = decoder_fwd(p["dec"], hl)
    return hl, next_l


def tanet_fwd(p, x_nchw):
    b, n, c, h, w = x_nchw.shape
    mid = NFRAMES // 2

    # module boundary: (B,N,C,H,W) -> channels-first "CM" layout (C, B, H, W)
    low = conv_cm(jnp.transpose(x_nchw[:, mid], (1, 0, 2, 3)), p["conv1"], 1, 1, slope=PRELU)

    xf = jnp.transpose(x_nchw.reshape(b * n, c, h, w), (1, 0, 2, 3))      # (C, B*N, H, W)
    l1 = conv_cm(xf, p["enc_conv"], 1, 1, slope=LRELU)
    l1 = resblocks_fwd(p["enc_res"], l1)
    l2 = conv_cm(l1, p["l2c1"], 2, 1, slope=LRELU)
    l2 = conv_cm(l2, p["l2c2"], 1, 1, slope=LRELU)
    l3 = conv_cm(l2, p["l3c1"], 2, 1, slope=LRELU)
    l3 = conv_cm(l3, p["l3c2"], 1, 1, slope=LRELU)

    l1 = l1.reshape(CM, b, n, h, w)
    l2 = l2.reshape(CM, b, n, h // 2, w // 2)
    l3 = l3.reshape(CM, b, n, h // 4, w // 4)

    ref = jnp.concatenate([l1[:, :, mid],
                           _up_nearest(l2[:, :, mid], 2),
                           _up_nearest(l3[:, :, mid], 4)], axis=0)

    h_list = []
    for fid in range(NFRAMES):
        nbr = jnp.concatenate([l1[:, :, fid],
                               _up_nearest(l2[:, :, fid], 2),
                               _up_nearest(l3[:, :, fid], 4)], axis=0)
        # TODO(synk): true PCD_Align (deformable conv pyramid) approximated by a single
        # 3x3 fusion conv over concat(nbr pyramid, ref pyramid).
        m = conv_cm(jnp.concatenate([nbr, ref], axis=0), p["pcd"], 1, 1, slope=LRELU)
        hf, low = projection_fwd(p["proj"], m, low)
        h_list.append(hf)

    out = conv_cm(jnp.concatenate(h_list, axis=0), p["rec"], 1, 1, slope=None)
    return jnp.transpose(out, (1, 0, 2, 3))               # back to NCHW


# ----------------------------------------------------------------------------
if __name__ == "__main__":
    B, H, W = 1, 8, 8
    kg = KeyGen(0)
    params = make_tanet(kg)

    x = jax.random.normal(jax.random.PRNGKey(0),
                          (B, NFRAMES, INPUT_NC, H, W), jnp.float32)

    out = tanet_fwd(params, x)
    out = jax.block_until_ready(out)
    assert out.shape == (B, OUTPUT_NC, 4 * H, 4 * W), out.shape
    assert bool(jnp.all(jnp.isfinite(out)))
    print("KERNEL_OK")
</pallas_src>

<mosaic_0001>
module attributes {stable_mosaic.version = 11 : i64} {
  func.func @_mm_kernel(%arg0: i32, %arg1: memref<8x27xbf16, #tpu.memory_space<vmem>>, %arg2: memref<8x1xf32, #tpu.memory_space<vmem>>, %arg3: memref<27x128xbf16, #tpu.memory_space<vmem>>, %arg4: memref<8x128xf32, #tpu.memory_space<vmem>>) attributes {dimension_semantics = [#tpu.dimension_semantics<parallel>], iteration_bounds = array<i64: 1>, scalar_prefetch = 0 : i64, scratch_operands = 0 : i64, tpu.core_type = #tpu.core_type<tc>, window_params = [{pipeline_mode = #tpu.pipeline_mode<synchronous>, transform_indices = @transform_0, window_bounds = array<i64: 8, 27>}, {pipeline_mode = #tpu.pipeline_mode<synchronous>, transform_indices = @transform_1, window_bounds = array<i64: 8, 1>}, {transform_indices = @transform_2, window_bounds = array<i64: 27, 128>}, {transform_indices = @transform_3, window_bounds = array<i64: 8, 128>}]} {
    %c0 = arith.constant 0 : index
    %c0_0 = arith.constant 0 : index
    %0 = vector.load %arg1[%c0, %c0_0] : memref<8x27xbf16, #tpu.memory_space<vmem>>, vector<8x27xbf16>
    %c0_1 = arith.constant 0 : index
    %c0_2 = arith.constant 0 : index
    %1 = vector.load %arg3[%c0_1, %c0_2] : memref<27x128xbf16, #tpu.memory_space<vmem>>, vector<27x128xbf16>
    %cst = arith.constant dense<0.000000e+00> : vector<8x128xf32>
    %2 = tpu.matmul %0, %1, %cst {dimension_numbers = #tpu.dot_dimension_numbers<[1], [0], [0], [1], [0, 0, 1, 1], [], []>} : vector<8x27xbf16>, vector<27x128xbf16>, vector<8x128xf32> -> vector<8x128xf32>
    %c0_3 = arith.constant 0 : index
    %c0_4 = arith.constant 0 : index
    %3 = vector.load %arg2[%c0_3, %c0_4] : memref<8x1xf32, #tpu.memory_space<vmem>>, vector<8x1xf32>
    %4 = vector.broadcast %3 : vector<8x1xf32> to vector<8x128xf32>
    %5 = arith.addf %2, %4 : vector<8x128xf32>
    %cst_5 = arith.constant 0.000000e+00 : f32
    %6 = vector.broadcast %cst_5 : f32 to vector<8x128xf32>
    %7 = arith.maximumf %5, %6 : vector<8x128xf32>
    %cst_6 = arith.constant 0.000000e+00 : f32
    %8 = vector.broadcast %cst_6 : f32 to vector<8x128xf32>
    %9 = arith.minimumf %5, %8 : vector<8x128xf32>
    %cst_7 = arith.constant 2.500000e-01 : f32
    %10 = vector.broadcast %cst_7 : f32 to vector<8x128xf32>
    %11 = arith.mulf %10, %9 : vector<8x128xf32>
    %12 = arith.addf %7, %11 : vector<8x128xf32>
    %c0_8 = arith.constant 0 : index
    %c0_9 = arith.constant 0 : index
    %13 = vector.load %arg4[%c0_8, %c0_9] : memref<8x128xf32, #tpu.memory_space<vmem>>, vector<8x128xf32>
    tpu.vector_store %arg4[%c0_8, %c0_9], %12 {strides = array<i32>} : memref<8x128xf32, #tpu.memory_space<vmem>>, vector<8x128xf32>,
    return
  }
  func.func @transform_0(%arg0: i32) -> (i32, i32) {
    %c0_i32 = arith.constant 0 : i32
    %c0_i32_0 = arith.constant 0 : i32
    %c0_i32_1 = arith.constant 0 : i32
    return %c0_i32, %c0_i32_0 : i32, i32
  }
  func.func @transform_1(%arg0: i32) -> (i32, i32) {
    %c0_i32 = arith.constant 0 : i32
    %c0_i32_0 = arith.constant 0 : i32
    %c0_i32_1 = arith.constant 0 : i32
    return %c0_i32, %c0_i32_0 : i32, i32
  }
  func.func @transform_2(%arg0: i32) -> (i32, i32) {
    %c0_i32 = arith.constant 0 : i32
    %c0_i32_0 = arith.constant 0 : i32
    return %c0_i32, %arg0 : i32, i32
  }
  func.func @transform_3(%arg0: i32) -> (i32, i32) {
    %c0_i32 = arith.constant 0 : i32
    %c0_i32_0 = arith.constant 0 : i32
    return %c0_i32, %arg0 : i32, i32
  }
}

</mosaic_0001>

<llo_original>
// kernel: tpu_custom_call.1
$region0: #{tpu_custom_call.1}
  #allocation0 [shape = 'u32[]', space=smem, size = 0x4, offset = 0x4, fixed_abs, tag = 'smem constant byte address 0x4 - core index']
  #allocation1 [shape = 'u32[144,128]{1,0:T(1,128)}', space=vmem, size = 0x12000, scoped, tag = 'internal scratch']
  %s0 = inlined_call_operand.hbm [shape: bf16[8,27], index: 0, kind: input, shape index: {}]
  %s1 = inlined_call_operand.vmem [shape: f32[8,1], index: 1, kind: input, shape index: {}]
  %s2 = inlined_call_operand.vmem [shape: bf16[27,128], index: 2, kind: input, shape index: {}]
  %s3 = inlined_call_operand.hbm [shape: f32[8,128], index: 3, kind: output, shape index: {}]
  %s4 = sld [smem:[#allocation0]]
  $region26: #{tpu_custom_call.1} parent=0
    _
  %s6 = ssub.s32 1, %s4
  %s7 = scalar_select 0, %s6, %s4
  $region1: #{tpu_custom_call.1} parent=0
    #allocation2 [shape = 'u8[2048]{0}', space=vmem, size = 0x800, scoped, tag = 'input window, operand 0, single buffered']
    #allocation3 [shape = 's32[1]{0}', space=sflag, size = 0x4, scoped, tag = 'scoped memory for tpu_custom_call.1']
    #allocation4 [shape = 's32[1]{0}', space=sflag, size = 0x4, scoped, tag = 'scoped memory for tpu_custom_call.1']
    #allocation5 [shape = 'u8[4096]{0}', space=vmem, size = 0x1000, scoped, tag = 'output window, operand 0, single buffered']
    %8 = vsyncpa [#allocation3], 0
    %9 = vsyncpa [#allocation4], 0
    // Predicated region
    $region2: #{tpu_custom_call.1} parent=1 // pred_check
      _
    $region3: #{tpu_custom_call.1} parent=1 // pred_check_branch
      %11 = sbr.rel (0) target = $region5
    $region4: #{tpu_custom_call.1} parent=1 // pred_region
      %s13 = ssub.s32 64, 64
      %14 = vsyncadd [#allocation3], %s13
      %s16 = sshll.u32 [#allocation2], 4
      %s17 = int_to_ptr.vmem [resolvable:$true] %s16
      %19 = dma.hbm_to_vmem [thread:$0]  %s0, 64, %s17, [#allocation3]
    $region5: #{tpu_custom_call.1} parent=1 // pred_fallthru
      _
    // Predicated region
    $region6: #{tpu_custom_call.1} parent=1 // pred_check
      _
    $region7: #{tpu_custom_call.1} parent=1 // pred_check_branch
      %21 = sbr.rel (0) target = $region9
    $region8: #{tpu_custom_call.1} parent=1 // pred_region
      _
    $region9: #{tpu_custom_call.1} parent=1 // pred_fallthru
      _
    // Predicated region
    $region10: #{tpu_custom_call.1} parent=1 // pred_check
      _
    $region11: #{tpu_custom_call.1} parent=1 // pred_check_branch
      %23 = sbr.rel (0) target = $region13
    $region12: #{tpu_custom_call.1} parent=1 // pred_region
      _
    $region13: #{tpu_custom_call.1} parent=1 // pred_fallthru
      _
    // Predicated region
    $region14: #{tpu_custom_call.1} parent=1 // pred_check
      _
    $region15: #{tpu_custom_call.1} parent=1 // pred_check_branch
      %25 = sbr.rel (0) target = $region17
    $region16: #{tpu_custom_call.1} parent=1 // pred_region
      %26 = dma.done [#allocation3], 64
    $region17: #{tpu_custom_call.1} parent=1 // pred_fallthru
      _
    %v28 = vld [vmem:[#allocation2] sm:$0xf]
    %v29 = vld [vmem:[%s2] sm:$0xf]
    %v30 = vld [vmem:[%s2 + $0x4] sm:$0xf]
    %v31 = vld [vmem:[%s2 + $0x8] sm:$0xf]
    %v32 = vld [vmem:[%s2 + $0xc] sm:$0x3]
    %v33 = vld [vmem:[%s1] sm:$0xff]
    %35 = vset.pattern.permute.xlu0 0
    %36 = vperm.xlu0 %35, %v33
    %v37 = vpop.permute.xlu0 %36
    %v43 = vunpack.c.l.b16 %v29
    %v44 = vunpack.c.l.b16 %v30
    %v45 = vunpack.c.l.b16 %v31
    %v46 = vunpack.c.l.b16 %v32
    %v47 = vpack.c.b16 %v44, %v43
    %v48 = vpack.c.b16 %v46, %v45
    %vm50 = vcmask 220160
    %v52 = vsel %vm50, %v28, 0
    %vm54 = vcmask 1044480
    %vm55 = vcmask 1045504
    %v56 = vsel %vm54, 4294967295, 65535
    %v57 = vsel %vm55, %v56, 0
    %v59 = vand.u32 %v48, %v57
    %61 = vmatprep.subr.bf16.mxu0 0
    %62 = vmatpush1.bf16.msra.mxu0 %v47
    %63 = vmatprep.subr.bf16.mxu0 0
    %64 = vmatpush1.bf16.msra.mxu0 %v59
    %65 = vmatprep.subr.bf16.mxu0 0
    %66 = vmatpush1.bf16.msra.mxu0 0
    %67 = vmatprep.subr.bf16.mxu0 0
    %68 = vmatpush1.bf16.msra.mxu0 0
    %69 = vmatprep.subr.bf16.mxu0 0
    %70 = vmatpush1.bf16.msra.mxu0 0
    %71 = vmatprep.subr.bf16.mxu0 0
    %72 = vmatpush1.bf16.msra.mxu0 0
    %73 = vmatprep.subr.bf16.mxu0 0
    %74 = vmatpush1.bf16.msra.mxu0 0
    %75 = vmatprep.subr.bf16.mxu0 0
    %76 = vmatpush1.bf16.msra.mxu0 0
    %77 = vmatprep.subr.bf16.mxu0 0
    %78 = vmatpush1.bf16.msra.mxu0 0
    %79 = vmatprep.subr.bf16.mxu0 0
    %80 = vmatpush1.bf16.msra.mxu0 0
    %81 = vmatprep.subr.bf16.mxu0 0
    %82 = vmatpush1.bf16.msra.mxu0 0
    %83 = vmatprep.subr.bf16.mxu0 0
    %84 = vmatpush1.bf16.msra.mxu0 0
    %85 = vmatprep.subr.bf16.mxu0 0
    %86 = vmatpush1.bf16.msra.mxu0 0
    %87 = vmatprep.subr.bf16.mxu0 0
    %88 = vmatpush1.bf16.msra.mxu0 0
    %89 = vmatprep.subr.bf16.mxu0 0
    %90 = vmatpush1.bf16.msra.mxu0 0
    %91 = vmatprep.subr.bf16.mxu0 0
    %92 = vmatpush1.bf16.msra.mxu0 0
    %93 = vmatprep.mubr.bf16.mxu0 0
    %94 = vmatmul.mubr.bf16.gmra.mrb[0].mxu0 %v52
    %v95 = vpop.f32.mrb[0].mxu0
    %v96 = vadd.f32 %v37, %v95
    %v97 = vpop.f32.mrb[0].mxu0
    %v98 = vpop.f32.mrb[0].mxu0
    %v99 = vpop.f32.mrb[0].mxu0
    %100 = vdwg.mxu0
    %v101 = vmax.f32 %v96, 0.0
    %v102 = vmin.f32 %v96, 0.0
    %v103 = vmul.f32 %v102, 0.25
    %v104 = vadd.f32 %v101, %v103
    %105 = vst [vmem:[#allocation5] sm:$0xff] %v104
    // Predicated region
    $region18: #{tpu_custom_call.1} parent=1 // pred_check
      _
    $region19: #{tpu_custom_call.1} parent=1 // pred_check_branch
      %107 = sbr.rel (0) target = $region21
    $region20: #{tpu_custom_call.1} parent=1 // pred_region
      %s109 = ssub.s32 128, 128
      %110 = vsyncadd [#allocation4], %s109
      %s112 = sshll.u32 [#allocation5], 4
      %s113 = int_to_ptr.vmem [resolvable:$true] %s112
      %115 = dma.vmem_to_hbm [thread:$0]  %s113, 128, %s3, [#allocation4]
    $region21: #{tpu_custom_call.1} parent=1 // pred_fallthru
      _
    // Predicated region
    $region22: #{tpu_custom_call.1} parent=1 // pred_check
      _
    $region23: #{tpu_custom_call.1} parent=1 // pred_check_branch
      %117 = sbr.rel (0) target = $region25
    $region24: #{tpu_custom_call.1} parent=1 // pred_region
      %118 = dma.done [#allocation4], 128
    $region25: #{tpu_custom_call.1} parent=1 // pred_fallthru
      _
    %119 = vsyncpa [#allocation3], 1
    %120 = vsyncpa [#allocation4], 1

</llo_original>
